<compile_context>
chip_gen: v7x
topology: tpu7x:2x2x1
jax: 0.10.0
libtpu: 0.0.40
codegen_flags: <defaults>
</compile_context>

<pallas_src>
import jax
import jax.numpy as jnp
from jax.experimental import pallas as pl
from jax.experimental.pallas import tpu as pltpu


def _point_mlp_kernel(pf_ref, w1_ref, b1_ref, w2_ref, b2_ref, w3_ref, b3_ref,
                      out_ref):
    """BN-folded 1x1-conv MLP on the batched prefix slab.

    pf_ref  : VMEM (C0, P)    f32   P = B * 3 (all batch elements' first-3
                                    point columns; points on the lane axis)
    wK_ref  : VMEM (Ck, Ck-1) f32   BN-folded 1x1 conv weights (resident)
    bK_ref  : VMEM (Ck, 1)    f32   BN-folded biases (lane-broadcast)
    out_ref : VMEM (C3, P)    f32
    """
    y = jnp.dot(w1_ref[...], pf_ref[...],
                preferred_element_type=jnp.float32) + b1_ref[...]
    y = jnp.maximum(y, 0.0)
    y = jnp.dot(w2_ref[...], y, preferred_element_type=jnp.float32) + b2_ref[...]
    y = jnp.maximum(y, 0.0)
    y = jnp.dot(w3_ref[...], y, preferred_element_type=jnp.float32) + b3_ref[...]
    out_ref[...] = y


def _fold_bn(w, b, gamma, beta, mean, var, eps=1e-5):
    """Fold eval-mode BatchNorm1d into a 1x1 Conv1d (exact algebraic fold)."""
    scale = gamma / jnp.sqrt(var + eps)
    w_f = (w * scale[:, None]).astype(jnp.float32)
    b_f = (scale * (b - mean) + beta).astype(jnp.float32)
    return w_f, b_f.reshape(-1, 1)


def point_extract(x, params, eps=1e-5):
    """Equivalent of PointExtractMoudle(mlps).forward(x) in eval mode.

    x      : [B, C0, N] (Conv1d layout), any float dtype (dtype is preserved
             for the copied portion of the output).
    params : 3 tuples of (w, b, gamma, beta, running_mean, running_var)
    returns: [B, C0, N + 3]  (N + min(3, N) if N < 3, matching Python slicing)
    """
    B, C0, N = x.shape
    (w1, b1), (w2, b2), (w3, b3) = (_fold_bn(*p, eps=eps) for p in params)
    C1, C2, C3 = w1.shape[0], w2.shape[0], w3.shape[0]
    assert C3 == C0, "mlps[3] must equal mlps[0] for the concat (as in torch)"

    # Pre-slice the 3-point prefix in the wrapper (tiny) and batch it across
    # the whole batch so the kernel runs each layer as ONE matmul.
    pf = x[:, :, :3]                                   # (B, C0, p), p = min(3, N)
    p = pf.shape[2]
    P = B * p
    slab = jnp.transpose(pf, (1, 0, 2)).reshape(C0, P).astype(jnp.float32)

    feat_slab = pl.pallas_call(
        _point_mlp_kernel,
        out_shape=jax.ShapeDtypeStruct((C3, P), jnp.float32),
        grid=(1,),
        in_specs=[
            pl.BlockSpec((C0, P), lambda i: (0, 0)),
            pl.BlockSpec((C1, C0), lambda i: (0, 0)),
            pl.BlockSpec((C1, 1), lambda i: (0, 0)),
            pl.BlockSpec((C2, C1), lambda i: (0, 0)),
            pl.BlockSpec((C2, 1), lambda i: (0, 0)),
            pl.BlockSpec((C3, C2), lambda i: (0, 0)),
            pl.BlockSpec((C3, 1), lambda i: (0, 0)),
        ],
        out_specs=pl.BlockSpec((C3, P), lambda i: (0, 0)),
        compiler_params=pltpu.CompilerParams(
            dimension_semantics=("arbitrary",)),
    )(slab, w1, b1, w2, b2, w3, b3)

    feat = jnp.transpose(feat_slab.reshape(C3, B, p), (1, 0, 2)).astype(x.dtype)

    # Per the review: the bulk of x is never touched by the kernel; the fused
    # [x, feat] layout required by the module is produced by XLA's concat
    # (roofline copy).  Callers that can consume (x, feat) separately should
    # skip this concat entirely.
    return jnp.concatenate([x, feat], axis=2)


def _reference(x, params, eps=1e-5):
    """Pure-JAX reference matching the torch forward (eval-mode BN)."""
    def conv_bn(y, w, b, gamma, beta, mean, var, relu):
        y = jnp.einsum('oi,bil->bol', w, y) + b[None, :, None]
        y = gamma[None, :, None] * (y - mean[None, :, None]) \
            / jnp.sqrt(var[None, :, None] + eps) + beta[None, :, None]
        return jnp.maximum(y, 0.0) if relu else y

    pf = x[:, :, :3]
    pf = conv_bn(pf, *params[0], relu=True)
    pf = conv_bn(pf, *params[1], relu=True)
    pf = conv_bn(pf, *params[2], relu=False)
    return jnp.concatenate([x, pf], axis=2)


if __name__ == "__main__":
    key = jax.random.PRNGKey(0)
    keys = jax.random.split(key, 8)

    B, N = 2, 16
    mlps = (8, 32, 64, 8)          # mlps[3] == mlps[0] required by the concat

    x = jax.random.normal(keys[0], (B, mlps[0], N), dtype=jnp.float32)

    def make_layer(k, c_in, c_out):
        kw, kb, kg, kbe, km, kv = jax.random.split(k, 6)
        w = 0.2 * jax.random.normal(kw, (c_out, c_in), jnp.float32)
        b = 0.1 * jax.random.normal(kb, (c_out,), jnp.float32)
        gamma = 1.0 + 0.1 * jax.random.normal(kg, (c_out,), jnp.float32)
        beta = 0.1 * jax.random.normal(kbe, (c_out,), jnp.float32)
        mean = 0.1 * jax.random.normal(km, (c_out,), jnp.float32)
        var = jax.random.uniform(kv, (c_out,), jnp.float32, 0.5, 1.5)
        return (w, b, gamma, beta, mean, var)

    params = (make_layer(keys[1], mlps[0], mlps[1]),
              make_layer(keys[2], mlps[1], mlps[2]),
              make_layer(keys[3], mlps[2], mlps[3]))

    out = point_extract(x, params)
    out = jax.block_until_ready(out)

    ref = _reference(x, params)
    assert out.shape == (B, mlps[0], N + 3), out.shape
    assert out.dtype == x.dtype, out.dtype
    max_err = float(jnp.max(jnp.abs(out - ref)))
    assert jnp.allclose(out, ref, rtol=1e-4, atol=1e-4), max_err

    print("KERNEL_OK")
</pallas_src>

<mosaic_0001>
module attributes {stable_mosaic.version = 11 : i64} {
  func.func @_point_mlp_kernel(%arg0: i32, %arg1: memref<8x6xf32, #tpu.memory_space<vmem>>, %arg2: memref<32x8xf32, #tpu.memory_space<vmem>>, %arg3: memref<32x1xf32, #tpu.memory_space<vmem>>, %arg4: memref<64x32xf32, #tpu.memory_space<vmem>>, %arg5: memref<64x1xf32, #tpu.memory_space<vmem>>, %arg6: memref<8x64xf32, #tpu.memory_space<vmem>>, %arg7: memref<8x1xf32, #tpu.memory_space<vmem>>, %arg8: memref<8x6xf32, #tpu.memory_space<vmem>>) attributes {dimension_semantics = [#tpu.dimension_semantics<arbitrary>], iteration_bounds = array<i64: 1>, scalar_prefetch = 0 : i64, scratch_operands = 0 : i64, tpu.core_type = #tpu.core_type<tc>, window_params = [{pipeline_mode = #tpu.pipeline_mode<synchronous>, transform_indices = @transform_0, window_bounds = array<i64: 8, 6>}, {pipeline_mode = #tpu.pipeline_mode<synchronous>, transform_indices = @transform_1, window_bounds = array<i64: 32, 8>}, {pipeline_mode = #tpu.pipeline_mode<synchronous>, transform_indices = @transform_2, window_bounds = array<i64: 32, 1>}, {pipeline_mode = #tpu.pipeline_mode<synchronous>, transform_indices = @transform_3, window_bounds = array<i64: 64, 32>}, {pipeline_mode = #tpu.pipeline_mode<synchronous>, transform_indices = @transform_4, window_bounds = array<i64: 64, 1>}, {pipeline_mode = #tpu.pipeline_mode<synchronous>, transform_indices = @transform_5, window_bounds = array<i64: 8, 64>}, {pipeline_mode = #tpu.pipeline_mode<synchronous>, transform_indices = @transform_6, window_bounds = array<i64: 8, 1>}, {pipeline_mode = #tpu.pipeline_mode<synchronous>, transform_indices = @transform_7, window_bounds = array<i64: 8, 6>}]} {
    %c0 = arith.constant 0 : index
    %c0_0 = arith.constant 0 : index
    %0 = vector.load %arg2[%c0, %c0_0] : memref<32x8xf32, #tpu.memory_space<vmem>>, vector<32x8xf32>
    %c0_1 = arith.constant 0 : index
    %c0_2 = arith.constant 0 : index
    %1 = vector.load %arg1[%c0_1, %c0_2] : memref<8x6xf32, #tpu.memory_space<vmem>>, vector<8x6xf32>
    %cst = arith.constant dense<0.000000e+00> : vector<32x6xf32>
    %2 = tpu.matmul %0, %1, %cst {dimension_numbers = #tpu.dot_dimension_numbers<[1], [0], [0], [1], [0, 0, 1, 1], [], []>} : vector<32x8xf32>, vector<8x6xf32>, vector<32x6xf32> -> vector<32x6xf32>
    %c0_3 = arith.constant 0 : index
    %c0_4 = arith.constant 0 : index
    %3 = vector.load %arg3[%c0_3, %c0_4] : memref<32x1xf32, #tpu.memory_space<vmem>>, vector<32x1xf32>
    %4 = vector.broadcast %3 : vector<32x1xf32> to vector<32x6xf32>
    %5 = arith.addf %2, %4 : vector<32x6xf32>
    %cst_5 = arith.constant 0.000000e+00 : f32
    %6 = vector.broadcast %cst_5 : f32 to vector<32x6xf32>
    %7 = arith.maximumf %5, %6 : vector<32x6xf32>
    %c0_6 = arith.constant 0 : index
    %c0_7 = arith.constant 0 : index
    %8 = vector.load %arg4[%c0_6, %c0_7] : memref<64x32xf32, #tpu.memory_space<vmem>>, vector<64x32xf32>
    %cst_8 = arith.constant dense<0.000000e+00> : vector<64x6xf32>
    %9 = tpu.matmul %8, %7, %cst_8 {dimension_numbers = #tpu.dot_dimension_numbers<[1], [0], [0], [1], [0, 0, 1, 1], [], []>} : vector<64x32xf32>, vector<32x6xf32>, vector<64x6xf32> -> vector<64x6xf32>
    %c0_9 = arith.constant 0 : index
    %c0_10 = arith.constant 0 : index
    %10 = vector.load %arg5[%c0_9, %c0_10] : memref<64x1xf32, #tpu.memory_space<vmem>>, vector<64x1xf32>
    %11 = vector.broadcast %10 : vector<64x1xf32> to vector<64x6xf32>
    %12 = arith.addf %9, %11 : vector<64x6xf32>
    %cst_11 = arith.constant 0.000000e+00 : f32
    %13 = vector.broadcast %cst_11 : f32 to vector<64x6xf32>
    %14 = arith.maximumf %12, %13 : vector<64x6xf32>
    %c0_12 = arith.constant 0 : index
    %c0_13 = arith.constant 0 : index
    %15 = vector.load %arg6[%c0_12, %c0_13] : memref<8x64xf32, #tpu.memory_space<vmem>>, vector<8x64xf32>
    %cst_14 = arith.constant dense<0.000000e+00> : vector<8x6xf32>
    %16 = tpu.matmul %15, %14, %cst_14 {dimension_numbers = #tpu.dot_dimension_numbers<[1], [0], [0], [1], [0, 0, 1, 1], [], []>} : vector<8x64xf32>, vector<64x6xf32>, vector<8x6xf32> -> vector<8x6xf32>
    %c0_15 = arith.constant 0 : index
    %c0_16 = arith.constant 0 : index
    %17 = vector.load %arg7[%c0_15, %c0_16] : memref<8x1xf32, #tpu.memory_space<vmem>>, vector<8x1xf32>
    %18 = vector.broadcast %17 : vector<8x1xf32> to vector<8x6xf32>
    %19 = arith.addf %16, %18 : vector<8x6xf32>
    %c0_17 = arith.constant 0 : index
    %c0_18 = arith.constant 0 : index
    %20 = vector.load %arg8[%c0_17, %c0_18] : memref<8x6xf32, #tpu.memory_space<vmem>>, vector<8x6xf32>
    tpu.vector_store %arg8[%c0_17, %c0_18], %19 {strides = array<i32>} : memref<8x6xf32, #tpu.memory_space<vmem>>, vector<8x6xf32>,
    return
  }
  func.func @transform_0(%arg0: i32) -> (i32, i32) {
    %c0_i32 = arith.constant 0 : i32
    %c0_i32_0 = arith.constant 0 : i32
    %c0_i32_1 = arith.constant 0 : i32
    return %c0_i32, %c0_i32_0 : i32, i32
  }
  func.func @transform_1(%arg0: i32) -> (i32, i32) {
    %c0_i32 = arith.constant 0 : i32
    %c0_i32_0 = arith.constant 0 : i32
    %c0_i32_1 = arith.constant 0 : i32
    return %c0_i32, %c0_i32_0 : i32, i32
  }
  func.func @transform_2(%arg0: i32) -> (i32, i32) {
    %c0_i32 = arith.constant 0 : i32
    %c0_i32_0 = arith.constant 0 : i32
    %c0_i32_1 = arith.constant 0 : i32
    return %c0_i32, %c0_i32_0 : i32, i32
  }
  func.func @transform_3(%arg0: i32) -> (i32, i32) {
    %c0_i32 = arith.constant 0 : i32
    %c0_i32_0 = arith.constant 0 : i32
    %c0_i32_1 = arith.constant 0 : i32
    return %c0_i32, %c0_i32_0 : i32, i32
  }
  func.func @transform_4(%arg0: i32) -> (i32, i32) {
    %c0_i32 = arith.constant 0 : i32
    %c0_i32_0 = arith.constant 0 : i32
    %c0_i32_1 = arith.constant 0 : i32
    return %c0_i32, %c0_i32_0 : i32, i32
  }
  func.func @transform_5(%arg0: i32) -> (i32, i32) {
    %c0_i32 = arith.constant 0 : i32
    %c0_i32_0 = arith.constant 0 : i32
    %c0_i32_1 = arith.constant 0 : i32
    return %c0_i32, %c0_i32_0 : i32, i32
  }
  func.func @transform_6(%arg0: i32) -> (i32, i32) {
    %c0_i32 = arith.constant 0 : i32
    %c0_i32_0 = arith.constant 0 : i32
    %c0_i32_1 = arith.constant 0 : i32
    return %c0_i32, %c0_i32_0 : i32, i32
  }
  func.func @transform_7(%arg0: i32) -> (i32, i32) {
    %c0_i32 = arith.constant 0 : i32
    %c0_i32_0 = arith.constant 0 : i32
    %c0_i32_1 = arith.constant 0 : i32
    return %c0_i32, %c0_i32_0 : i32, i32
  }
}

</mosaic_0001>

<llo_original>
// kernel: tpu_custom_call.1
$region0: #{tpu_custom_call.1}
  #allocation0 [shape = 'u32[]', space=smem, size = 0x4, offset = 0x4, fixed_abs, tag = 'smem constant byte address 0x4 - core index']
  #allocation1 [shape = 'u32[144,128]{1,0:T(1,128)}', space=vmem, size = 0x12000, scoped, tag = 'internal scratch']
  %s0 = inlined_call_operand.vmem [shape: f32[8,6], index: 0, kind: input, shape index: {}]
  %s1 = inlined_call_operand.vmem [shape: f32[32,8], index: 1, kind: input, shape index: {}]
  %s2 = inlined_call_operand.vmem [shape: f32[32,1], index: 2, kind: input, shape index: {}]
  %s3 = inlined_call_operand.vmem [shape: f32[64,32], index: 3, kind: input, shape index: {}]
  %s4 = inlined_call_operand.vmem [shape: f32[64,1], index: 4, kind: input, shape index: {}]
  %s5 = inlined_call_operand.vmem [shape: f32[8,64], index: 5, kind: input, shape index: {}]
  %s6 = inlined_call_operand.vmem [shape: f32[8,1], index: 6, kind: input, shape index: {}]
  %s7 = inlined_call_operand.hbm [shape: f32[8,6], index: 7, kind: output, shape index: {}]
  %s8 = sld [smem:[#allocation0]]
  $region38: #{tpu_custom_call.1} parent=0
    _
  %s10 = ssub.s32 1, %s8
  %s11 = scalar_select 0, %s10, %s8
  $region1: #{tpu_custom_call.1} parent=0
    #allocation2 [shape = 'u8[4096]{0}', space=vmem, size = 0x1000, scoped, tag = 'output window, operand 0, single buffered']
    #allocation3 [shape = 's32[1]{0}', space=sflag, size = 0x4, scoped, tag = 'scoped memory for tpu_custom_call.1']
    %12 = vsyncpa [#allocation3], 0
    // Predicated region
    $region2: #{tpu_custom_call.1} parent=1 // pred_check
      _
    $region3: #{tpu_custom_call.1} parent=1 // pred_check_branch
      %14 = sbr.rel (0) target = $region5
    $region4: #{tpu_custom_call.1} parent=1 // pred_region
      _
    $region5: #{tpu_custom_call.1} parent=1 // pred_fallthru
      _
    // Predicated region
    $region6: #{tpu_custom_call.1} parent=1 // pred_check
      _
    $region7: #{tpu_custom_call.1} parent=1 // pred_check_branch
      %16 = sbr.rel (0) target = $region9
    $region8: #{tpu_custom_call.1} parent=1 // pred_region
      _
    $region9: #{tpu_custom_call.1} parent=1 // pred_fallthru
      _
    // Predicated region
    $region10: #{tpu_custom_call.1} parent=1 // pred_check
      _
    $region11: #{tpu_custom_call.1} parent=1 // pred_check_branch
      %18 = sbr.rel (0) target = $region13
    $region12: #{tpu_custom_call.1} parent=1 // pred_region
      _
    $region13: #{tpu_custom_call.1} parent=1 // pred_fallthru
      _
    // Predicated region
    $region14: #{tpu_custom_call.1} parent=1 // pred_check
      _
    $region15: #{tpu_custom_call.1} parent=1 // pred_check_branch
      %20 = sbr.rel (0) target = $region17
    $region16: #{tpu_custom_call.1} parent=1 // pred_region
      _
    $region17: #{tpu_custom_call.1} parent=1 // pred_fallthru
      _
    // Predicated region
    $region18: #{tpu_custom_call.1} parent=1 // pred_check
      _
    $region19: #{tpu_custom_call.1} parent=1 // pred_check_branch
      %22 = sbr.rel (0) target = $region21
    $region20: #{tpu_custom_call.1} parent=1 // pred_region
      _
    $region21: #{tpu_custom_call.1} parent=1 // pred_fallthru
      _
    // Predicated region
    $region22: #{tpu_custom_call.1} parent=1 // pred_check
      _
    $region23: #{tpu_custom_call.1} parent=1 // pred_check_branch
      %24 = sbr.rel (0) target = $region25
    $region24: #{tpu_custom_call.1} parent=1 // pred_region
      _
    $region25: #{tpu_custom_call.1} parent=1 // pred_fallthru
      _
    // Predicated region
    $region26: #{tpu_custom_call.1} parent=1 // pred_check
      _
    $region27: #{tpu_custom_call.1} parent=1 // pred_check_branch
      %26 = sbr.rel (0) target = $region29
    $region28: #{tpu_custom_call.1} parent=1 // pred_region
      _
    $region29: #{tpu_custom_call.1} parent=1 // pred_fallthru
      _
    %v27 = vld [vmem:[%s1] sm:$0xff]
    %v28 = vld [vmem:[%s1 + $0x8] sm:$0xff]
    %v29 = vld [vmem:[%s1 + $0x10] sm:$0xff]
    %v30 = vld [vmem:[%s1 + $0x18] sm:$0xff]
    %v31 = vld [vmem:[%s0] sm:$0xff]
    %v32 = vld [vmem:[%s2] sm:$0xff]
    %v33 = vld [vmem:[%s2 + $0x8] sm:$0xff]
    %v34 = vld [vmem:[%s2 + $0x10] sm:$0xff]
    %v35 = vld [vmem:[%s2 + $0x18] sm:$0xff]
    %37 = vset.pattern.permute.xlu0 0
    %38 = vperm.xlu0 %37, %v32
    %v39 = vpop.permute.xlu0 %38
    %42 = vset.pattern.permute.xlu0 0
    %43 = vperm.xlu0 %42, %v33
    %v44 = vpop.permute.xlu0 %43
    %47 = vset.pattern.permute.xlu0 0
    %48 = vperm.xlu0 %47, %v34
    %v49 = vpop.permute.xlu0 %48
    %52 = vset.pattern.permute.xlu0 0
    %53 = vperm.xlu0 %52, %v35
    %v54 = vpop.permute.xlu0 %53
    %vm56 = vcmask 64512
    %v58 = vsel %vm56, %v27, 0
    %v61 = vsel %vm56, %v28, 0
    %v64 = vsel %vm56, %v29, 0
    %v67 = vsel %vm56, %v30, 0
    %69 = vmatprep.subr.mxu0 0.0
    %70 = vmatpush1.msra.mxu0 %v31
    %71 = vmatprep.subr.mxu0 0.0
    %72 = vmatpush1.msra.mxu0 0.0
    %73 = vmatprep.subr.mxu0 0.0
    %74 = vmatpush1.msra.mxu0 0.0
    %75 = vmatprep.subr.mxu0 0.0
    %76 = vmatpush1.msra.mxu0 0.0
    %77 = vmatprep.subr.mxu0 0.0
    %78 = vmatpush1.msra.mxu0 0.0
    %79 = vmatprep.subr.mxu0 0.0
    %80 = vmatpush1.msra.mxu0 0.0
    %81 = vmatprep.subr.mxu0 0.0
    %82 = vmatpush1.msra.mxu0 0.0
    %83 = vmatprep.subr.mxu0 0.0
    %84 = vmatpush1.msra.mxu0 0.0
    %85 = vmatprep.subr.mxu0 0.0
    %86 = vmatpush1.msra.mxu0 0.0
    %87 = vmatprep.subr.mxu0 0.0
    %88 = vmatpush1.msra.mxu0 0.0
    %89 = vmatprep.subr.mxu0 0.0
    %90 = vmatpush1.msra.mxu0 0.0
    %91 = vmatprep.subr.mxu0 0.0
    %92 = vmatpush1.msra.mxu0 0.0
    %93 = vmatprep.subr.mxu0 0.0
    %94 = vmatpush1.msra.mxu0 0.0
    %95 = vmatprep.subr.mxu0 0.0
    %96 = vmatpush1.msra.mxu0 0.0
    %97 = vmatprep.subr.mxu0 0.0
    %98 = vmatpush1.msra.mxu0 0.0
    %99 = vmatprep.subr.mxu0 0.0
    %100 = vmatpush1.msra.mxu0 0.0
    %101 = vmatprep.subr.mxu0 0.0
    %102 = vmatpush1.msra.mxu0 0.0
    %103 = vmatprep.subr.mxu0 0.0
    %104 = vmatpush1.msra.mxu0 0.0
    %105 = vmatprep.subr.mxu0 0.0
    %106 = vmatpush1.msra.mxu0 0.0
    %107 = vmatprep.subr.mxu0 0.0
    %108 = vmatpush1.msra.mxu0 0.0
    %109 = vmatprep.subr.mxu0 0.0
    %110 = vmatpush1.msra.mxu0 0.0
    %111 = vmatprep.subr.mxu0 0.0
    %112 = vmatpush1.msra.mxu0 0.0
    %113 = vmatprep.subr.mxu0 0.0
    %114 = vmatpush1.msra.mxu0 0.0
    %115 = vmatprep.subr.mxu0 0.0
    %116 = vmatpush1.msra.mxu0 0.0
    %117 = vmatprep.subr.mxu0 0.0
    %118 = vmatpush1.msra.mxu0 0.0
    %119 = vmatprep.subr.mxu0 0.0
    %120 = vmatpush1.msra.mxu0 0.0
    %121 = vmatprep.subr.mxu0 0.0
    %122 = vmatpush1.msra.mxu0 0.0
    %123 = vmatprep.subr.mxu0 0.0
    %124 = vmatpush1.msra.mxu0 0.0
    %125 = vmatprep.subr.mxu0 0.0
    %126 = vmatpush1.msra.mxu0 0.0
    %127 = vmatprep.subr.mxu0 0.0
    %128 = vmatpush1.msra.mxu0 0.0
    %129 = vmatprep.subr.mxu0 0.0
    %130 = vmatpush1.msra.mxu0 0.0
    %131 = vmatprep.subr.mxu0 0.0
    %132 = vmatpush1.msra.mxu0 0.0
    %133 = vmatprep.mubr.f32.mxu0 0.0
    %134 = vmatmul.mubr.f32.gmra.mrb[0].mxu0 %v58
    %v135 = vpop.f32.mrb[0].mxu0
    %v136 = vadd.f32 %v39, %v135
    %v137 = vpop.f32.mrb[0].mxu0
    %138 = vmatprep.mubr.f32.mxu0 0.0
    %139 = vmatmul.mubr.f32.gmra.mrb[0].mxu0 %v61
    %v140 = vpop.f32.mrb[0].mxu0
    %v141 = vadd.f32 %v44, %v140
    %v142 = vpop.f32.mrb[0].mxu0
    %143 = vmatprep.mubr.f32.mxu0 0.0
    %144 = vmatmul.mubr.f32.gmra.mrb[0].mxu0 %v64
    %v145 = vpop.f32.mrb[0].mxu0
    %v146 = vadd.f32 %v49, %v145
    %v147 = vpop.f32.mrb[0].mxu0
    %148 = vmatprep.mubr.f32.mxu0 0.0
    %149 = vmatmul.mubr.f32.gmra.mrb[0].mxu0 %v67
    %v150 = vpop.f32.mrb[0].mxu0
    %v151 = vadd.f32 %v54, %v150
    %v152 = vpop.f32.mrb[0].mxu0
    %153 = vdwg.mxu0
    %v154 = vmax.f32 %v136, 0.0
    %v155 = vmax.f32 %v141, 0.0
    %v156 = vmax.f32 %v146, 0.0
    %v157 = vmax.f32 %v151, 0.0
    %v158 = vld [vmem:[%s3] sm:$0xff]
    %v159 = vld [vmem:[%s3 + $0x8] sm:$0xff]
    %v160 = vld [vmem:[%s3 + $0x10] sm:$0xff]
    %v161 = vld [vmem:[%s3 + $0x18] sm:$0xff]
    %v162 = vld [vmem:[%s3 + $0x20] sm:$0xff]
    %v163 = vld [vmem:[%s3 + $0x28] sm:$0xff]
    %v164 = vld [vmem:[%s3 + $0x30] sm:$0xff]
    %v165 = vld [vmem:[%s3 + $0x38] sm:$0xff]
    %v166 = vld [vmem:[%s4] sm:$0xff]
    %v167 = vld [vmem:[%s4 + $0x8] sm:$0xff]
    %v168 = vld [vmem:[%s4 + $0x10] sm:$0xff]
    %v169 = vld [vmem:[%s4 + $0x18] sm:$0xff]
    %v170 = vld [vmem:[%s4 + $0x20] sm:$0xff]
    %v171 = vld [vmem:[%s4 + $0x28] sm:$0xff]
    %v172 = vld [vmem:[%s4 + $0x30] sm:$0xff]
    %v173 = vld [vmem:[%s4 + $0x38] sm:$0xff]
    %175 = vset.pattern.permute.xlu0 0
    %176 = vperm.xlu0 %175, %v166
    %v177 = vpop.permute.xlu0 %176
    %180 = vset.pattern.permute.xlu0 0
    %181 = vperm.xlu0 %180, %v167
    %v182 = vpop.permute.xlu0 %181
    %185 = vset.pattern.permute.xlu0 0
    %186 = vperm.xlu0 %185, %v168
    %v187 = vpop.permute.xlu0 %186
    %190 = vset.pattern.permute.xlu0 0
    %191 = vperm.xlu0 %190, %v169
    %v192 = vpop.permute.xlu0 %191
    %195 = vset.pattern.permute.xlu0 0
    %196 = vperm.xlu0 %195, %v170
    %v197 = vpop.permute.xlu0 %196
    %200 = vset.pattern.permute.xlu0 0
    %201 = vperm.xlu0 %200, %v171
    %v202 = vpop.permute.xlu0 %201
    %205 = vset.pattern.permute.xlu0 0
    %206 = vperm.xlu0 %205, %v172
    %v207 = vpop.permute.xlu0 %206
    %210 = vset.pattern.permute.xlu0 0
    %211 = vperm.xlu0 %210, %v173
    %v212 = vpop.permute.xlu0 %211
    %vm214 = vcmask 261120
    %v216 = vsel %vm214, %v158, 0
    %v219 = vsel %vm214, %v159, 0
    %v222 = vsel %vm214, %v160, 0
    %v225 = vsel %vm214, %v161, 0
    %v228 = vsel %vm214, %v162, 0
    %v231 = vsel %vm214, %v163, 0
    %v234 = vsel %vm214, %v164, 0
    %v237 = vsel %vm214, %v165, 0
    %239 = vmatprep.subr.mxu0 0.0
    %240 = vmatpush1.msra.mxu0 %v154
    %241 = vmatprep.subr.mxu0 0.0
    %242 = vmatpush1.msra.mxu0 %v155
    %243 = vmatprep.subr.mxu0 0.0
    %244 = vmatpush1.msra.mxu0 %v156
    %245 = vmatprep.subr.mxu0 0.0
    %246 = vmatpush1.msra.mxu0 %v157
    %247 = vmatprep.subr.mxu0 0.0
    %248 = vmatpush1.msra.mxu0 0.0
    %249 = vmatprep.subr.mxu0 0.0
    %250 = vmatpush1.msra.mxu0 0.0
    %251 = vmatprep.subr.mxu0 0.0
    %252 = vmatpush1.msra.mxu0 0.0
    %253 = vmatprep.subr.mxu0 0.0
    %254 = vmatpush1.msra.mxu0 0.0
    %255 = vmatprep.subr.mxu0 0.0
    %256 = vmatpush1.msra.mxu0 0.0
    %257 = vmatprep.subr.mxu0 0.0
    %258 = vmatpush1.msra.mxu0 0.0
    %259 = vmatprep.subr.mxu0 0.0
    %260 = vmatpush1.msra.mxu0 0.0
    %261 = vmatprep.subr.mxu0 0.0
    %262 = vmatpush1.msra.mxu0 0.0
    %263 = vmatprep.subr.mxu0 0.0
    %264 = vmatpush1.msra.mxu0 0.0
    %265 = vmatprep.subr.mxu0 0.0
    %266 = vmatpush1.msra.mxu0 0.0
    %267 = vmatprep.subr.mxu0 0.0
    %268 = vmatpush1.msra.mxu0 0.0
    %269 = vmatprep.subr.mxu0 0.0
    %270 = vmatpush1.msra.mxu0 0.0
    %271 = vmatprep.subr.mxu0 0.0
    %272 = vmatpush1.msra.mxu0 0.0
    %273 = vmatprep.subr.mxu0 0.0
    %274 = vmatpush1.msra.mxu0 0.0
    %275 = vmatprep.subr.mxu0 0.0
    %276 = vmatpush1.msra.mxu0 0.0
    %277 = vmatprep.subr.mxu0 0.0
    %278 = vmatpush1.msra.mxu0 0.0
    %279 = vmatprep.subr.mxu0 0.0
    %280 = vmatpush1.msra.mxu0 0.0
    %281 = vmatprep.subr.mxu0 0.0
    %282 = vmatpush1.msra.mxu0 0.0
    %283 = vmatprep.subr.mxu0 0.0
    %284 = vmatpush1.msra.mxu0 0.0
    %285 = vmatprep.subr.mxu0 0.0
    %286 = vmatpush1.msra.mxu0 0.0
    %287 = vmatprep.subr.mxu0 0.0
    %288 = vmatpush1.msra.mxu0 0.0
    %289 = vmatprep.subr.mxu0 0.0
    %290 = vmatpush1.msra.mxu0 0.0
    %291 = vmatprep.subr.mxu0 0.0
    %292 = vmatpush1.msra.mxu0 0.0
    %293 = vmatprep.subr.mxu0 0.0
    %294 = vmatpush1.msra.mxu0 0.0
    %295 = vmatprep.subr.mxu0 0.0
    %296 = vmatpush1.msra.mxu0 0.0
    %297 = vmatprep.subr.mxu0 0.0
    %298 = vmatpush1.msra.mxu0 0.0
    %299 = vmatprep.subr.mxu0 0.0
    %300 = vmatpush1.msra.mxu0 0.0
    %301 = vmatprep.subr.mxu0 0.0
    %302 = vmatpush1.msra.mxu0 0.0
    %303 = vmatprep.mubr.f32.mxu0 0.0
    %304 = vmatmul.mubr.f32.gmra.mrb[0].mxu0 %v216
    %v305 = vpop.f32.mrb[0].mxu0
    %v306 = vadd.f32 %v177, %v305
    %v307 = vpop.f32.mrb[0].mxu0
    %308 = vmatprep.mubr.f32.mxu0 0.0
    %309 = vmatmul.mubr.f32.gmra.mrb[0].mxu0 %v219
    %v310 = vpop.f32.mrb[0].mxu0
    %v311 = vadd.f32 %v182, %v310
    %v312 = vpop.f32.mrb[0].mxu0
    %313 = vmatprep.mubr.f32.mxu0 0.0
    %314 = vmatmul.mubr.f32.gmra.mrb[0].mxu0 %v222
    %v315 = vpop.f32.mrb[0].mxu0
    %v316 = vadd.f32 %v187, %v315
    %v317 = vpop.f32.mrb[0].mxu0
    %318 = vmatprep.mubr.f32.mxu0 0.0
    %319 = vmatmul.mubr.f32.gmra.mrb[0].mxu0 %v225
    %v320 = vpop.f32.mrb[0].mxu0
    %v321 = vadd.f32 %v192, %v320
    %v322 = vpop.f32.mrb[0].mxu0
    %323 = vmatprep.mubr.f32.mxu0 0.0
    %324 = vmatmul.mubr.f32.gmra.mrb[0].mxu0 %v228
    %v325 = vpop.f32.mrb[0].mxu0
    %v326 = vadd.f32 %v197, %v325
    %v327 = vpop.f32.mrb[0].mxu0
    %328 = vmatprep.mubr.f32.mxu0 0.0
    %329 = vmatmul.mubr.f32.gmra.mrb[0].mxu0 %v231
    %v330 = vpop.f32.mrb[0].mxu0
    %v331 = vadd.f32 %v202, %v330
    %v332 = vpop.f32.mrb[0].mxu0
    %333 = vmatprep.mubr.f32.mxu0 0.0
    %334 = vmatmul.mubr.f32.gmra.mrb[0].mxu0 %v234
    %v335 = vpop.f32.mrb[0].mxu0
    %v336 = vadd.f32 %v207, %v335
    %v337 = vpop.f32.mrb[0].mxu0
    %338 = vmatprep.mubr.f32.mxu0 0.0
    %339 = vmatmul.mubr.f32.gmra.mrb[0].mxu0 %v237
    %v340 = vpop.f32.mrb[0].mxu0
    %v341 = vadd.f32 %v212, %v340
    %v342 = vpop.f32.mrb[0].mxu0
    %343 = vdwg.mxu0
    %v344 = vmax.f32 %v306, 0.0
    %v345 = vmax.f32 %v311, 0.0
    %v346 = vmax.f32 %v316, 0.0
    %v347 = vmax.f32 %v321, 0.0
    %v348 = vmax.f32 %v326, 0.0
    %v349 = vmax.f32 %v331, 0.0
    %v350 = vmax.f32 %v336, 0.0
    %v351 = vmax.f32 %v341, 0.0
    %v352 = vld [vmem:[%s5] sm:$0xff]
    %v353 = vld [vmem:[%s6] sm:$0xff]
    %355 = vset.pattern.permute.xlu0 0
    %356 = vperm.xlu0 %355, %v353
    %v357 = vpop.permute.xlu0 %356
    %vm359 = vcmask 523264
    %v361 = vsel %vm359, %v352, 0
    %363 = vmatprep.subr.mxu0 0.0
    %364 = vmatpush1.msra.mxu0 %v344
    %365 = vmatprep.subr.mxu0 0.0
    %366 = vmatpush1.msra.mxu0 %v345
    %367 = vmatprep.subr.mxu0 0.0
    %368 = vmatpush1.msra.mxu0 %v346
    %369 = vmatprep.subr.mxu0 0.0
    %370 = vmatpush1.msra.mxu0 %v347
    %371 = vmatprep.subr.mxu0 0.0
    %372 = vmatpush1.msra.mxu0 %v348
    %373 = vmatprep.subr.mxu0 0.0
    %374 = vmatpush1.msra.mxu0 %v349
    %375 = vmatprep.subr.mxu0 0.0
    %376 = vmatpush1.msra.mxu0 %v350
    %377 = vmatprep.subr.mxu0 0.0
    %378 = vmatpush1.msra.mxu0 %v351
    %379 = vmatprep.subr.mxu0 0.0
    %380 = vmatpush1.msra.mxu0 0.0
    %381 = vmatprep.subr.mxu0 0.0
    %382 = vmatpush1.msra.mxu0 0.0
    %383 = vmatprep.subr.mxu0 0.0
    %384 = vmatpush1.msra.mxu0 0.0
    %385 = vmatprep.subr.mxu0 0.0
    %386 = vmatpush1.msra.mxu0 0.0
    %387 = vmatprep.subr.mxu0 0.0
    %388 = vmatpush1.msra.mxu0 0.0
    %389 = vmatprep.subr.mxu0 0.0
    %390 = vmatpush1.msra.mxu0 0.0
    %391 = vmatprep.subr.mxu0 0.0
    %392 = vmatpush1.msra.mxu0 0.0
    %393 = vmatprep.subr.mxu0 0.0
    %394 = vmatpush1.msra.mxu0 0.0
    %395 = vmatprep.subr.mxu0 0.0
    %396 = vmatpush1.msra.mxu0 0.0
    %397 = vmatprep.subr.mxu0 0.0
    %398 = vmatpush1.msra.mxu0 0.0
    %399 = vmatprep.subr.mxu0 0.0
    %400 = vmatpush1.msra.mxu0 0.0
    %401 = vmatprep.subr.mxu0 0.0
    %402 = vmatpush1.msra.mxu0 0.0
    %403 = vmatprep.subr.mxu0 0.0
    %404 = vmatpush1.msra.mxu0 0.0
    %405 = vmatprep.subr.mxu0 0.0
    %406 = vmatpush1.msra.mxu0 0.0
    %407 = vmatprep.subr.mxu0 0.0
    %408 = vmatpush1.msra.mxu0 0.0
    %409 = vmatprep.subr.mxu0 0.0
    %410 = vmatpush1.msra.mxu0 0.0
    %411 = vmatprep.subr.mxu0 0.0
    %412 = vmatpush1.msra.mxu0 0.0
    %413 = vmatprep.subr.mxu0 0.0
    %414 = vmatpush1.msra.mxu0 0.0
    %415 = vmatprep.subr.mxu0 0.0
    %416 = vmatpush1.msra.mxu0 0.0
    %417 = vmatprep.subr.mxu0 0.0
    %418 = vmatpush1.msra.mxu0 0.0
    %419 = vmatprep.subr.mxu0 0.0
    %420 = vmatpush1.msra.mxu0 0.0
    %421 = vmatprep.subr.mxu0 0.0
    %422 = vmatpush1.msra.mxu0 0.0
    %423 = vmatprep.subr.mxu0 0.0
    %424 = vmatpush1.msra.mxu0 0.0
    %425 = vmatprep.subr.mxu0 0.0
    %426 = vmatpush1.msra.mxu0 0.0
    %427 = vmatprep.mubr.f32.mxu0 0.0
    %428 = vmatmul.mubr.f32.gmra.mrb[0].mxu0 %v361
    %v429 = vpop.f32.mrb[0].mxu0
    %v430 = vadd.f32 %v357, %v429
    %v431 = vpop.f32.mrb[0].mxu0
    %432 = vdwg.mxu0
    %vm433 = vcmask 48128
    %434 = vst.msk [vmem:[#allocation2] sm:$0xff] %vm433, %v430
    // Predicated region
    $region30: #{tpu_custom_call.1} parent=1 // pred_check
      _
    $region31: #{tpu_custom_call.1} parent=1 // pred_check_branch
      %436 = sbr.rel (0) target = $region33
    $region32: #{tpu_custom_call.1} parent=1 // pred_region
      %s438 = ssub.s32 128, 128
      %439 = vsyncadd [#allocation3], %s438
      %s441 = sshll.u32 [#allocation2], 4
      %s442 = int_to_ptr.vmem [resolvable:$true] %s441
      %444 = dma.vmem_to_hbm [thread:$0]  %s442, 128, %s7, [#allocation3]
    $region33: #{tpu_custom_call.1} parent=1 // pred_fallthru
      _
    // Predicated region
    $region34: #{tpu_custom_call.1} parent=1 // pred_check
      _
    $region35: #{tpu_custom_call.1} parent=1 // pred_check_branch
      %446 = sbr.rel (0) target = $region37
    $region36: #{tpu_custom_call.1} parent=1 // pred_region
      %447 = dma.done [#allocation3], 128
    $region37: #{tpu_custom_call.1} parent=1 // pred_fallthru
      _
    %448 = vsyncpa [#allocation3], 1

</llo_original>
